<compile_context>
chip_gen: v7x
topology: tpu7x:2x2x1
jax: 0.10.0
libtpu: 0.0.40
codegen_flags: <defaults>
</compile_context>

<pallas_src>
import jax
import jax.numpy as jnp
from jax.experimental import pallas as pl
from jax.experimental.pallas import tpu as pltpu

EPS = 1e-5
NEG_SLOPE = 0.01  # nn.LeakyReLU default


def _round_up(x, m):
    return (x + m - 1) // m * m


def _device_vmem_budget():
    """(tile-sizing budget bytes, vmem_limit_bytes) -- generation aware."""
    try:
        kind = jax.devices()[0].device_kind.lower()
    except Exception:
        kind = ""
    if any(t in kind for t in ("v2", "v3", "v4", "v5", "v6")):
        return 80 * 2**20, 100 * 2**20      # 128 MiB physical VMEM: use big tiles
    return 28 * 2**20, 40 * 2**20           # v7x / unknown: stay well under 64 MiB


def _pick_hw_tile(hw, kp, cp, cout, x_bytes, y_bytes, budget):
    """Largest power-of-two spatial tile that fits the double-buffered VMEM budget and does
    not inflate per-image padding beyond the minimal 128-lane alignment."""
    row1 = 2 * (kp * x_bytes + cp * y_bytes)        # pass 1: x + y blocks (double buffered)
    row2 = 2 * (cp * y_bytes + cout * 4)            # pass 2: y + out blocks
    const = 2 * cp * kp * x_bytes + (1 << 20)       # resident weights (2 bufs) + slack
    cap = max(128, (budget - const) // max(row1, row2))
    minimal = _round_up(hw, 128)
    best = 128
    for t in (128, 256, 512, 1024, 2048):
        if t > cap:
            break
        if _round_up(hw, t) == minimal:
            best = t
    return best


# ----------------------------- kernels ------------------------------------ #

def _conv_stats_kernel(x_ref, w_ref, y_ref, stats_ref):
    """Pass 1: one MXU matmul per spatial tile + per-tile BN partial stats.

    x_ref:     (Kp, T)     im2col columns (bf16/f32)
    w_ref:     (Cp, Kp)    packed 3x3 conv weights (grid-invariant block)
    y_ref:     (Cp, T)     conv output tile (bf16/f32), channel-major
    stats_ref: (1, Cp, 2)  per-tile [sum, sum_sq] over the T columns (f32)
    """
    y = jnp.dot(w_ref[...], x_ref[...], preferred_element_type=jnp.float32)  # (Cp, T) f32
    y_ref[...] = y.astype(y_ref.dtype)
    stats_ref[0, :, 0:1] = jnp.sum(y, axis=1, keepdims=True)
    stats_ref[0, :, 1:2] = jnp.sum(y * y, axis=1, keepdims=True)


def _norm_act_kernel(y_ref, scale_ref, shift_ref, o_ref):
    """Pass 2: folded BatchNorm (y*scale + shift) + LeakyReLU, stored directly into the
    final channel-major (N, Cout, H*W) layout (no output transpose glue)."""
    yn = y_ref[...].astype(jnp.float32) * scale_ref[...] + shift_ref[...]
    act = jnp.where(yn >= 0, yn, NEG_SLOPE * yn)
    o_ref[0, :, :] = act[: o_ref.shape[1], :]


# ----------------------------- wrapper ------------------------------------ #

def conv_norm_relu(x_nchw, weight, bias, gamma, beta, *, conv_dtype=jnp.bfloat16):
    """x_nchw: (N, Cin, H, W) f32; weight: (Cout, Cin, 3, 3); bias/gamma/beta: (Cout,).

    conv_dtype controls both the MXU operand dtype and the intermediate y dtype
    (default bf16 on all TPU generations -- MXU accumulation and all BN/activation math
    stay f32). Use conv_dtype=jnp.float32 for a bit-exact f32 path.
    """
    del bias  # Conv bias cancels exactly under training-mode BatchNorm (y - mean(y)).

    N, Cin, H, W = x_nchw.shape
    Cout = weight.shape[0]
    HW = H * W
    M = N * HW                                   # true per-channel element count for BN
    K = 9 * Cin
    x_bytes = jnp.dtype(conv_dtype).itemsize
    y_dtype = conv_dtype
    y_bytes = jnp.dtype(y_dtype).itemsize

    # Kp: bf16 packs 16 sublanes/vreg; large K aligned to MXU 128-strips.
    Kp = _round_up(K, 128) if K >= 512 else _round_up(K, 16)
    Cp = _round_up(Cout, 16)                     # channels are the sublane dim now

    budget, vmem_limit = _device_vmem_budget()
    T = _pick_hw_tile(HW, Kp, Cp, Cout, x_bytes, y_bytes, budget)
    HWp = _round_up(HW, T)                       # per-image spatial padding (zeros)
    G_hw = HWp // T
    Mp = N * HWp

    # ---- glue (HBM-side, XLA): channel-major im2col, zero-padded ----------
    # Remaining 9x copy of x; bf16 halves its HBM cost.  (Halo-tile direct conv for
    # large Cin would remove it entirely -- see header note.)
    x_sp = jnp.pad(x_nchw, ((0, 0), (0, 0), (1, 1), (1, 1)))            # SAME pad, k=3
    taps = [x_sp[:, :, dy:dy + H, dx:dx + W] for dy in range(3) for dx in range(3)]
    x_col = jnp.stack(taps, axis=0)                                     # (9, N, Cin, H, W)
    x_col = x_col.transpose(0, 2, 1, 3, 4).reshape(K, N, HW)            # (K, N, H*W)
    x_col = jnp.pad(x_col, ((0, Kp - K), (0, 0), (0, HWp - HW)))
    x_col = x_col.astype(conv_dtype).reshape(Kp, Mp)                    # (Kp, Mp)

    w_col = weight.transpose(0, 2, 3, 1).reshape(Cout, K)               # (Cout, 9*Cin)
    w_col = jnp.pad(w_col, ((0, Cp - Cout), (0, Kp - K))).astype(conv_dtype)

    # ---- pass 1: conv tiles + per-tile BN partial stats (pipelined) --------
    y, stats = pl.pallas_call(
        _conv_stats_kernel,
        grid=(Mp // T,),
        in_specs=[
            pl.BlockSpec((Kp, T), lambda i: (0, i)),
            pl.BlockSpec((Cp, Kp), lambda i: (0, 0)),      # grid-invariant: fetched once
        ],
        out_specs=[
            pl.BlockSpec((Cp, T), lambda i: (0, i)),
            pl.BlockSpec((1, Cp, 2), lambda i: (i, 0, 0)),
        ],
        out_shape=[
            jax.ShapeDtypeStruct((Cp, Mp), y_dtype),
            jax.ShapeDtypeStruct((Mp // T, Cp, 2), jnp.float32),
        ],
        compiler_params=pltpu.CompilerParams(
            dimension_semantics=("parallel",), vmem_limit_bytes=vmem_limit),
    )(x_col, w_col)

    # ---- finalize BN stats (tiny per-channel math) & fold into scale/shift --
    # Zero-padded spatial columns contribute 0 to both partial sums (no conv bias),
    # so dividing by the true M gives the exact training-mode batch statistics.
    s = jnp.sum(stats, axis=0)                               # (Cp, 2)
    mean = s[:, 0] / M
    var = jnp.maximum(s[:, 1] / M - mean * mean, 0.0)        # biased (training) variance
    inv = jax.lax.rsqrt(var + EPS)
    gamma_p = jnp.pad(gamma, (0, Cp - Cout))
    beta_p = jnp.pad(beta, (0, Cp - Cout))
    scale = (gamma_p * inv).reshape(Cp, 1).astype(jnp.float32)
    shift = (beta_p - mean * gamma_p * inv).reshape(Cp, 1).astype(jnp.float32)

    # ---- pass 2: normalize + LeakyReLU, write final (N, Cout, H*W) ---------
    out3 = pl.pallas_call(
        _norm_act_kernel,
        grid=(N, G_hw),
        in_specs=[
            pl.BlockSpec((Cp, T), lambda n, j: (0, n * G_hw + j)),
            pl.BlockSpec((Cp, 1), lambda n, j: (0, 0)),
            pl.BlockSpec((Cp, 1), lambda n, j: (0, 0)),
        ],
        out_specs=pl.BlockSpec((1, Cout, T), lambda n, j: (n, 0, j)),
        out_shape=jax.ShapeDtypeStruct((N, Cout, HWp), jnp.float32),
        compiler_params=pltpu.CompilerParams(
            dimension_semantics=("parallel", "parallel"), vmem_limit_bytes=vmem_limit),
    )(y, scale, shift)

    if HWp != HW:
        out3 = out3[:, :, :HW]
    return out3.reshape(N, Cout, H, W)


# ----------------------------- reference ---------------------------------- #

def _reference(x_nchw, weight, bias, gamma, beta):
    conv = jax.lax.conv_general_dilated(
        x_nchw, weight, window_strides=(1, 1), padding="SAME",
        dimension_numbers=("NCHW", "OIHW", "NCHW"))
    conv = conv + bias[None, :, None, None]
    mean = conv.mean(axis=(0, 2, 3), keepdims=True)
    var = ((conv - mean) ** 2).mean(axis=(0, 2, 3), keepdims=True)
    yn = gamma[None, :, None, None] * (conv - mean) / jnp.sqrt(var + EPS) \
        + beta[None, :, None, None]
    return jnp.where(yn >= 0, yn, NEG_SLOPE * yn)


if __name__ == "__main__":
    # Small shapes consistent with the module.
    N, Cin, Cout, H, W = 2, 4, 8, 16, 16

    key = jax.random.PRNGKey(0)
    kx, kw, kb, kg, kbe = jax.random.split(key, 5)
    x = jax.random.normal(kx, (N, Cin, H, W), jnp.float32)
    weight = jax.random.normal(kw, (Cout, Cin, 3, 3), jnp.float32) * 0.1
    bias = jax.random.normal(kb, (Cout,), jnp.float32) * 0.1
    gamma = 1.0 + 0.1 * jax.random.normal(kg, (Cout,), jnp.float32)
    beta = 0.1 * jax.random.normal(kbe, (Cout,), jnp.float32)

    ref = _reference(x, weight, bias, gamma, beta)

    # Default path: bf16 MXU operands + bf16 intermediate (f32 accumulation / BN math).
    out = conv_norm_relu(x, weight, bias, gamma, beta)
    jax.block_until_ready(out)
    assert out.shape == (N, Cout, H, W), out.shape
    assert jnp.allclose(out, ref, rtol=1e-1, atol=1e-1), \
        float(jnp.max(jnp.abs(out - ref)))

    # f32 path: bit-for-bit semantics of the module (tight tolerance).
    out_f32 = conv_norm_relu(x, weight, bias, gamma, beta, conv_dtype=jnp.float32)
    jax.block_until_ready(out_f32)
    assert out_f32.shape == (N, Cout, H, W), out_f32.shape
    assert jnp.allclose(out_f32, ref, rtol=1e-4, atol=1e-4), \
        float(jnp.max(jnp.abs(out_f32 - ref)))

    print("KERNEL_OK")
</pallas_src>

<mosaic_0001>
module attributes {stable_mosaic.version = 11 : i64} {
  func.func @_conv_stats_kernel(%arg0: i32, %arg1: memref<48x256xbf16, #tpu.memory_space<vmem>>, %arg2: memref<16x48xbf16, #tpu.memory_space<vmem>>, %arg3: memref<16x256xbf16, #tpu.memory_space<vmem>>, %arg4: memref<1x16x2xf32, #tpu.memory_space<vmem>>) attributes {dimension_semantics = [#tpu.dimension_semantics<parallel>], iteration_bounds = array<i64: 2>, scalar_prefetch = 0 : i64, scratch_operands = 0 : i64, tpu.core_type = #tpu.core_type<tc>, window_params = [{transform_indices = @transform_0, window_bounds = array<i64: 48, 256>}, {pipeline_mode = #tpu.pipeline_mode<synchronous>, transform_indices = @transform_1, window_bounds = array<i64: 16, 48>}, {transform_indices = @transform_2, window_bounds = array<i64: 16, 256>}, {transform_indices = @transform_3, window_bounds = array<i64: 1, 16, 2>}]} {
    %c0 = arith.constant 0 : index
    %c0_0 = arith.constant 0 : index
    %0 = vector.load %arg2[%c0, %c0_0] : memref<16x48xbf16, #tpu.memory_space<vmem>>, vector<16x48xbf16>
    %c0_1 = arith.constant 0 : index
    %c0_2 = arith.constant 0 : index
    %1 = vector.load %arg1[%c0_1, %c0_2] : memref<48x256xbf16, #tpu.memory_space<vmem>>, vector<48x256xbf16>
    %cst = arith.constant dense<0.000000e+00> : vector<16x256xf32>
    %2 = tpu.matmul %0, %1, %cst {dimension_numbers = #tpu.dot_dimension_numbers<[1], [0], [0], [1], [0, 0, 1, 1], [], []>} : vector<16x48xbf16>, vector<48x256xbf16>, vector<16x256xf32> -> vector<16x256xf32>
    %3 = arith.truncf %2 : vector<16x256xf32> to vector<16x256xbf16>
    %c0_3 = arith.constant 0 : index
    %c0_4 = arith.constant 0 : index
    %4 = vector.load %arg3[%c0_3, %c0_4] : memref<16x256xbf16, #tpu.memory_space<vmem>>, vector<16x256xbf16>
    tpu.vector_store %arg3[%c0_3, %c0_4], %3 {strides = array<i32>} : memref<16x256xbf16, #tpu.memory_space<vmem>>, vector<16x256xbf16>,
    %cst_5 = arith.constant dense<0.000000e+00> : vector<16xf32>
    %5 = vector.multi_reduction <add>, %2, %cst_5 [1] : vector<16x256xf32> to vector<16xf32>
    %6 = vector.shape_cast %5 : vector<16xf32> to vector<16x1xf32>
    %c0_6 = arith.constant 0 : index
    %c0_7 = arith.constant 0 : index
    %c0_8 = arith.constant 0 : index
    %7 = vector.load %arg4[%c0_6, %c0_7, %c0_8] : memref<1x16x2xf32, #tpu.memory_space<vmem>>, vector<1x16x1xf32>
    %8 = vector.shape_cast %7 : vector<1x16x1xf32> to vector<16x1xf32>
    %9 = vector.shape_cast %6 : vector<16x1xf32> to vector<1x16x1xf32>
    tpu.vector_store %arg4[%c0_6, %c0_7, %c0_8], %9 {strides = array<i32>} : memref<1x16x2xf32, #tpu.memory_space<vmem>>, vector<1x16x1xf32>,
    %10 = arith.mulf %2, %2 : vector<16x256xf32>
    %cst_9 = arith.constant dense<0.000000e+00> : vector<16xf32>
    %11 = vector.multi_reduction <add>, %10, %cst_9 [1] : vector<16x256xf32> to vector<16xf32>
    %12 = vector.shape_cast %11 : vector<16xf32> to vector<16x1xf32>
    %c0_10 = arith.constant 0 : index
    %c0_11 = arith.constant 0 : index
    %c1 = arith.constant 1 : index
    %13 = vector.load %arg4[%c0_10, %c0_11, %c1] : memref<1x16x2xf32, #tpu.memory_space<vmem>>, vector<1x16x1xf32>
    %14 = vector.shape_cast %13 : vector<1x16x1xf32> to vector<16x1xf32>
    %15 = vector.shape_cast %12 : vector<16x1xf32> to vector<1x16x1xf32>
    tpu.vector_store %arg4[%c0_10, %c0_11, %c1], %15 {strides = array<i32>} : memref<1x16x2xf32, #tpu.memory_space<vmem>>, vector<1x16x1xf32>,
    return
  }
  func.func @transform_0(%arg0: i32) -> (i32, i32) {
    %c0_i32 = arith.constant 0 : i32
    %c0_i32_0 = arith.constant 0 : i32
    return %c0_i32, %arg0 : i32, i32
  }
  func.func @transform_1(%arg0: i32) -> (i32, i32) {
    %c0_i32 = arith.constant 0 : i32
    %c0_i32_0 = arith.constant 0 : i32
    %c0_i32_1 = arith.constant 0 : i32
    return %c0_i32, %c0_i32_0 : i32, i32
  }
  func.func @transform_2(%arg0: i32) -> (i32, i32) {
    %c0_i32 = arith.constant 0 : i32
    %c0_i32_0 = arith.constant 0 : i32
    return %c0_i32, %arg0 : i32, i32
  }
  func.func @transform_3(%arg0: i32) -> (i32, i32, i32) {
    %c0_i32 = arith.constant 0 : i32
    %c0_i32_0 = arith.constant 0 : i32
    %c0_i32_1 = arith.constant 0 : i32
    return %arg0, %c0_i32, %c0_i32_0 : i32, i32, i32
  }
}

</mosaic_0001>

<llo_original>
// kernel: tpu_custom_call.1
$region0: #{tpu_custom_call.1}
  #allocation0 [shape = 'u32[]', space=smem, size = 0x4, offset = 0x4, fixed_abs, tag = 'smem constant byte address 0x4 - core index']
  #allocation1 [shape = 'u32[144,128]{1,0:T(1,128)}', space=vmem, size = 0x12000, scoped, tag = 'internal scratch']
  %s0 = inlined_call_operand.hbm [shape: bf16[48,512], index: 0, kind: input, shape index: {}]
  %s1 = inlined_call_operand.hbm [shape: bf16[16,48], index: 1, kind: input, shape index: {}]
  %s2 = inlined_call_operand.hbm [shape: bf16[16,512], index: 2, kind: output, shape index: {0}]
  %s3 = inlined_call_operand.vmem [shape: f32[2,16,2], index: 3, kind: output, shape index: {1}]
  %4 = xla_tuple %s2, %s3
  %s5 = sld [smem:[#allocation0]]
  $region57: #{tpu_custom_call.1} parent=0
    _
  %s7 = ssub.s32 1, %s5
  %s8 = scalar_select 0, %s7, %s5
  $region1: #{tpu_custom_call.1} parent=0
    #allocation2 [shape = 'u8[49152]{0}', space=vmem, size = 0xc000, scoped, tag = 'input window, operand 0']
    #allocation3 [shape = 's32[2]{0}', space=sflag, size = 0x8, scoped, tag = 'scoped memory for tpu_custom_call.1']
    #allocation4 [shape = 's32[2]{0}', space=sflag, size = 0x8, scoped, tag = 'scoped memory for tpu_custom_call.1']
    #allocation5 [shape = 'u8[4096]{0}', space=vmem, size = 0x1000, scoped, tag = 'input window, operand 1, single buffered']
    #allocation6 [shape = 's32[1]{0}', space=sflag, size = 0x4, scoped, tag = 'scoped memory for tpu_custom_call.1']
    #allocation7 [shape = 'u8[16384]{0}', space=vmem, size = 0x4000, scoped, tag = 'output window, operand 0']
    %9 = vsyncpa [#allocation3], 0
    %s10 = scalar_lea.sflag [#allocation3], 1
    %11 = vsyncpa %s10, 0
    %12 = vsyncpa [#allocation6], 0
    %13 = vsyncpa [#allocation4], 0
    %s14 = scalar_lea.sflag [#allocation4], 1
    %15 = vsyncpa %s14, 0
    loop: start=0, step=1, limit=4
    $region2: #{tpu_custom_call.1} parent=1 // loop_pre_header
      _
    $region3: #{tpu_custom_call.1} parent=1 // loop_header
      %s17 = sphi 0, %s21
      %p18 = scmp.ge.s32.totalorder %s17, 4
      %s27 = sphi 0, %s29
      %s30 = sphi 0, %s27
      %s31 = sphi 0, %s30
      %s47 = sphi 0, %s31
      %s51 = sphi 0, %s51
      %s53 = sphi 0, %s51
      %s54 = sphi 0, %s53
      %s68 = sphi 0, %s54
      %s74 = sphi 0, %s76
      %s77 = sphi 0, %s74
      %s78 = sphi 0, %s77
      %s94 = sphi 0, %s78
      %s100 = sphi 0, %s102
      %s103 = sphi 0, %s100
      %s104 = sphi 0, %s103
      %s120 = sphi 0, %s104
    $region4: #{tpu_custom_call.1} parent=1 // loop_header_branch
      %20 = sbr.rel (%p18) target = $region8
    $region5: #{tpu_custom_call.1} parent=1 // loop_body
      %s22 = ssub.s32 %s17, 1
      %s23 = ssub.s32 %s17, 2
      %s24 = sadd.s32 %s17, 1
      %s25 = ssub.s32 %s17, %s24
      %p26 = scmp.eq.s32.totalorder %s25, 0
      %s28 = sadd.s32 %s27, 1
      %s29 = scalar_select %p26, %s27, %s28
      %p32 = pneg %p26
      %p33 = scmp.eq.s32.totalorder %s17, 1
      %p34 = por %p32, %p33
      %p35 = scmp.ne.s32.totalorder %s27, %s30
      %p36 = scmp.eq.s32.totalorder %s17, 0
      %p37 = por %p35, %p36
      %p38 = scmp.ne.s32.totalorder %s27, %s30
      %p39 = scmp.eq.s32.totalorder %s22, 1
      %p40 = por %p38, %p39
      %p41 = scmp.ne.s32.totalorder %s30, %s31
      %p42 = scmp.eq.s32.totalorder %s22, 0
      %p43 = por %p41, %p42
      %p44 = scmp.ne.s32.totalorder %s30, %s31
      %p45 = scmp.eq.s32.totalorder %s23, 1
      %p46 = por %p44, %p45
      %p48 = scmp.ne.s32.totalorder %s31, %s47
      %p49 = scmp.eq.s32.totalorder %s23, 0
      %p50 = por %p48, %p49
      %s52 = sadd.s32 %s51, 1
      %p55 = scmp.eq.s32.totalorder %s17, 1
      %p56 = scmp.ne.s32.totalorder %s51, %s53
      %p57 = scmp.eq.s32.totalorder %s17, 0
      %p58 = por %p56, %p57
      %p59 = scmp.ne.s32.totalorder %s51, %s53
      %p60 = scmp.eq.s32.totalorder %s22, 1
      %p61 = por %p59, %p60
      %p62 = scmp.ne.s32.totalorder %s53, %s54
      %p63 = scmp.eq.s32.totalorder %s22, 0
      %p64 = por %p62, %p63
      %p65 = scmp.ne.s32.totalorder %s53, %s54
      %p66 = scmp.eq.s32.totalorder %s23, 1
      %p67 = por %p65, %p66
      %p69 = scmp.ne.s32.totalorder %s54, %s68
      %p70 = scmp.eq.s32.totalorder %s23, 0
      %p71 = por %p69, %p70
      %s72 = ssub.s32 %s17, %s24
      %p73 = scmp.eq.s32.totalorder %s72, 0
      %s75 = sadd.s32 %s74, 1
      %s76 = scalar_select %p73, %s74, %s75
      %p79 = pneg %p73
      %p80 = scmp.eq.s32.totalorder %s17, 1
      %p81 = por %p79, %p80
      %p82 = scmp.ne.s32.totalorder %s74, %s77
      %p83 = scmp.eq.s32.totalorder %s17, 0
      %p84 = por %p82, %p83
      %p85 = scmp.ne.s32.totalorder %s74, %s77
      %p86 = scmp.eq.s32.totalorder %s22, 1
      %p87 = por %p85, %p86
      %p88 = scmp.ne.s32.totalorder %s77, %s78
      %p89 = scmp.eq.s32.totalorder %s22, 0
      %p90 = por %p88, %p89
      %p91 = scmp.ne.s32.totalorder %s77, %s78
      %p92 = scmp.eq.s32.totalorder %s23, 1
      %p93 = por %p91, %p92
      %p95 = scmp.ne.s32.totalorder %s78, %s94
      %p96 = scmp.eq.s32.totalorder %s23, 0
      %p97 = por %p95, %p96
      %s98 = ssub.s32 %s17, %s24
      %p99 = scmp.eq.s32.totalorder %s98, 0
      %s101 = sadd.s32 %s100, 1
      %s102 = scalar_select %p99, %s100, %s101
      %p105 = pneg %p99
      %p106 = scmp.eq.s32.totalorder %s17, 1
      %p107 = por %p105, %p106
      %p108 = scmp.ne.s32.totalorder %s100, %s103
      %p109 = scmp.eq.s32.totalorder %s17, 0
      %p110 = por %p108, %p109
      %p111 = scmp.ne.s32.totalorder %s100, %s103
      %p112 = scmp.eq.s32.totalorder %s22, 1
      %p113 = por %p111, %p112
      %p114 = scmp.ne.s32.totalorder %s103, %s104
      %p115 = scmp.eq.s32.totalorder %s22, 0
      %p116 = por %p114, %p115
      %p117 = scmp.ne.s32.totalorder %s103, %s104
      %p118 = scmp.eq.s32.totalorder %s23, 1
      %p119 = por %p117, %p118
      %p121 = scmp.ne.s32.totalorder %s104, %s120
      %p122 = scmp.eq.s32.totalorder %s23, 0
      %p123 = por %p121, %p122
      %p124 = scmp.le.s32.totalorder 1, %s17
      %p125 = scmp.lt.s32.totalorder %s17, 3
      %p126 = pnand %p124, %p125
      %p127 = pneg %p126
      // Predicated region
      $region9: #{tpu_custom_call.1} parent=5 // pred_check
        _
      $region10: #{tpu_custom_call.1} parent=5 // pred_check_branch
        %129 = sbr.rel (%p126) target = $region12
      $region11: #{tpu_custom_call.1} parent=5 // pred_region
        %s130 = ssub.s32 %s17, 1
        // Predicated region
        $region13: #{tpu_custom_call.1} parent=11 // pred_check
          %p131 = pneg %p64
        $region14: #{tpu_custom_call.1} parent=11 // pred_check_branch
          %133 = sbr.rel (%p131) target = $region16
        $region15: #{tpu_custom_call.1} parent=11 // pred_region
          %s135 = ssub.s32 128, 128
          %136 = vsyncadd [#allocation6], %s135
          %s137 = sshll.u32 [#allocation5], 4
          %s138 = int_to_ptr.vmem [resolvable:$true] %s137
          %143 = dma.hbm_to_vmem [thread:$0]  %s1, 128, %s138, [#allocation6], 64, 64, 4
        $region16: #{tpu_custom_call.1} parent=11 // pred_fallthru
          _
      $region12: #{tpu_custom_call.1} parent=5 // pred_fallthru
        _
      %p144 = scmp.lt.s32.totalorder %s17, 2
      // Predicated region
      $region17: #{tpu_custom_call.1} parent=5 // pred_check
        %p145 = pneg %p144
      $region18: #{tpu_custom_call.1} parent=5 // pred_check_branch
        %147 = sbr.rel (%p145) target = $region20
      $region19: #{tpu_custom_call.1} parent=5 // pred_region
        // Predicated region
        $region21: #{tpu_custom_call.1} parent=19 // pred_check
          %p148 = pneg %p37
        $region22: #{tpu_custom_call.1} parent=19 // pred_check_branch
          %150 = sbr.rel (%p148) target = $region24
        $region23: #{tpu_custom_call.1} parent=19 // pred_region
          %s151 = sand.u32 %s27, 1
          %s152 = scalar_lea.sflag [#allocation3], %s151
          %s153 = sand.u32 %s27, 1
          %s154 = smul.addr %s153, 48
          %s155 = scalar_lea.vmem [#allocation2], %s154
          %s156 = smul.u32 2, %s17
          %s158 = ssub.s32 768, 768
          %159 = vsyncadd %s152, %s158
          %s160 = smul.addr %s156, 64
          %s161 = scalar_lea.hbm %s0, %s160
          %s162 = sshll.u32 %s155, 4
          %s163 = int_to_ptr.vmem [resolvable:$true] %s162
          %168 = dma.hbm_to_vmem [thread:$0]  %s161, 768, %s163, %s152, 256, 128, 8
        $region24: #{tpu_custom_call.1} parent=19 // pred_fallthru
          _
      $region20: #{tpu_custom_call.1} parent=5 // pred_fallthru
        _
      %p169 = scmp.le.s32.totalorder 1, %s17
      %p170 = scmp.lt.s32.totalorder %s17, 3
      %p171 = pnand %p169, %p170
      %p172 = pneg %p171
      // Predicated region
      $region25: #{tpu_custom_call.1} parent=5 // pred_check
        _
      $region26: #{tpu_custom_call.1} parent=5 // pred_check_branch
        %174 = sbr.rel (%p171) target = $region28
      $region27: #{tpu_custom_call.1} parent=5 // pred_region
        %s175 = ssub.s32 %s17, 1
        %s176 = sand.u32 %s30, 1
        %s177 = scalar_lea.sflag [#allocation3], %s176
        %s178 = sand.u32 %s30, 1
        %s179 = smul.addr %s178, 48
        %s180 = scalar_lea.vmem [#allocation2], %s179
        // Predicated region
        $region29: #{tpu_custom_call.1} parent=27 // pred_check
          %p181 = pneg %p43
        $region30: #{tpu_custom_call.1} parent=27 // pred_check_branch
          %183 = sbr.rel (%p181) target = $region32
        $region31: #{tpu_custom_call.1} parent=27 // pred_region
          %184 = dma.done %s177, 768
        $region32: #{tpu_custom_call.1} parent=27 // pred_fallthru
          _
        // Predicated region
        $region33: #{tpu_custom_call.1} parent=27 // pred_check
          %p185 = pneg %p64
        $region34: #{tpu_custom_call.1} parent=27 // pred_check_branch
          %187 = sbr.rel (%p185) target = $region36
        $region35: #{tpu_custom_call.1} parent=27 // pred_region
          %188 = dma.done [#allocation6], 128
        $region36: #{tpu_custom_call.1} parent=27 // pred_fallthru
          _
        %s189 = sand.u32 %s30, 1
        %s190 = scalar_lea.sflag [#allocation3], %s189
        %s191 = sand.u32 %s30, 1
        %s192 = smul.addr %s191, 48
        %s193 = scalar_lea.vmem [#allocation2], %s192
        %p194 = pneg %p43
        %p195 = pneg %p40
        %p196 = pneg %p64
        %p197 = pneg %p61
        %p198 = pneg %p90
        %p199 = pneg %p87
        %s200 = sand.u32 %s77, 1
        %s201 = scalar_lea.sflag [#allocation4], %s200
        %s202 = sand.u32 %s77, 1
        %s203 = smul.addr %s202, 16
        %s204 = scalar_lea.vmem [#allocation7], %s203
        %p205 = pneg %p116
        %p206 = pneg %p113
        %p207 = scmp.lt.s32.totalorder %s22, 1
        %s208 = scalar_select %p207, %s22, 1
        %s209 = smul.addr %s208, 2
        %s210 = smul.addr %s209, 8
        %s211 = scalar_lea.vmem %s3, %s210
        %s212 = smul.u32 2, %s22
        %s213 = smul.u32 2, %s22
        %p214 = scmp.lt.s32.totalorder %s22, 1
        %s215 = scalar_select %p214, %s22, 1
        %s216 = smul.addr %s215, 2
        %s217 = smul.addr %s216, 8
        %s218 = scalar_lea.vmem %s3, %s217
        %v220 = vld [vmem:[#allocation5] sm:$0xf]
        %v221 = vld [vmem:[#allocation5 + $0x4] sm:$0xf]
        %v222 = vld [vmem:[%s180] sm:$0xff]
        %v223 = vld [vmem:[%s180 + $0x8] sm:$0xff]
        %v224 = vld [vmem:[%s180 + $0x10] sm:$0xff]
        %v225 = vld [vmem:[%s180 + $0x18] sm:$0xff]
        %v226 = vld [vmem:[%s180 + $0x20] sm:$0xff]
        %v227 = vld [vmem:[%s180 + $0x28] sm:$0xff]
        %v230 = vunpack.c.l.b16 %v220
        %v231 = vunpack.c.l.b16 %v221
        %v232 = vpack.c.b16 %v231, %v230
        %v239 = vunpack.c.l.b16 %v222
        %v240 = vunpack.c.h.b16 %v222
        %v241 = vunpack.c.l.b16 %v223
        %v242 = vunpack.c.h.b16 %v223
        %v243 = vunpack.c.l.b16 %v224
        %v244 = vunpack.c.h.b16 %v224
        %v245 = vunpack.c.l.b16 %v225
        %v246 = vunpack.c.h.b16 %v225
        %v247 = vunpack.c.l.b16 %v226
        %v248 = vunpack.c.h.b16 %v226
        %v249 = vunpack.c.l.b16 %v227
        %v250 = vunpack.c.h.b16 %v227
        %v251 = vpack.c.b16 %v241, %v239
        %v252 = vpack.c.b16 %v242, %v240
        %v253 = vpack.c.b16 %v245, %v243
        %v254 = vpack.c.b16 %v246, %v244
        %v255 = vpack.c.b16 %v249, %v247
        %v256 = vpack.c.b16 %v250, %v248
        %vm263 = vcmask 392192
        %v265 = vsel %vm263, %v232, 0
        %267 = vmatprep.subr.bf16.mxu0 %v252
        %268 = vmatpush1.bf16.msra.mxu0 %v251
        %269 = vmatprep.subr.bf16.mxu0 %v254
        %270 = vmatpush1.bf16.msra.mxu0 %v253
        %271 = vmatprep.subr.bf16.mxu0 %v256
        %272 = vmatpush1.bf16.msra.mxu0 %v255
        %273 = vmatprep.subr.bf16.mxu0 0
        %274 = vmatpush1.bf16.msra.mxu0 0
        %275 = vmatprep.subr.bf16.mxu0 0
        %276 = vmatpush1.bf16.msra.mxu0 0
        %277 = vmatprep.subr.bf16.mxu0 0
        %278 = vmatpush1.bf16.msra.mxu0 0
        %279 = vmatprep.subr.bf16.mxu0 0
        %280 = vmatpush1.bf16.msra.mxu0 0
        %281 = vmatprep.subr.bf16.mxu0 0
        %282 = vmatpush1.bf16.msra.mxu0 0
        %283 = vmatprep.subr.bf16.mxu0 0
        %284 = vmatpush1.bf16.msra.mxu0 0
        %285 = vmatprep.subr.bf16.mxu0 0
        %286 = vmatpush1.bf16.msra.mxu0 0
        %287 = vmatprep.subr.bf16.mxu0 0
        %288 = vmatpush1.bf16.msra.mxu0 0
        %289 = vmatprep.subr.bf16.mxu0 0
        %290 = vmatpush1.bf16.msra.mxu0 0
        %291 = vmatprep.subr.bf16.mxu0 0
        %292 = vmatpush1.bf16.msra.mxu0 0
        %293 = vmatprep.subr.bf16.mxu0 0
        %294 = vmatpush1.bf16.msra.mxu0 0
        %295 = vmatprep.subr.bf16.mxu0 0
        %296 = vmatpush1.bf16.msra.mxu0 0
        %297 = vmatprep.subr.bf16.mxu0 0
        %298 = vmatpush1.bf16.msra.mxu0 0
        %299 = vmatprep.mubr.bf16.mxu0 0
        %300 = vmatmul.mubr.bf16.gmra.mrb[0].mxu0 %v265
        %v301 = vpop.f32.mrb[0].mxu0
        %v302 = vadd.f32 0.0, %v301
        %v303 = vpop.f32.mrb[0].mxu0
        %v304 = vadd.f32 0.0, %v303
        %v305 = vpop.f32.mrb[0].mxu0
        %v306 = vadd.f32 0.0, %v305
        %v307 = vpop.f32.mrb[0].mxu0
        %v308 = vadd.f32 0.0, %v307
        %309 = vdwg.mxu0
        %v310 = vpack.c.bf16 %v306, %v302
        %v311 = vpack.c.bf16 %v308, %v304
        %v314 = vunpack.c.l.b16 %v310
        %v315 = vunpack.c.l.b16 %v311
        %v316 = vunpack.c.h.b16 %v310
        %v317 = vunpack.c.h.b16 %v311
        %v318 = vpack.c.b16 %v315, %v314
        %v319 = vpack.c.b16 %v317, %v316
        %322 = vst [vmem:[%s204] sm:$0xff] %v318
        %323 = vst [vmem:[%s204 + $0x8] sm:$0xff] %v319
        %v324 = vadd.f32 %v302, %v304
        %325 = vadd.xlane.f32.xlu0 %v324
        %v326 = vpop.xlane.xlu0 %325
        %v327 = vadd.f32 %v306, %v308
        %328 = vadd.xlane.f32.xlu0 %v327
        %v329 = vpop.xlane.xlu0 %328
        %vm330 = vcmask 7168
        %331 = vst.msk [vmem:[%s218] sm:$0xff] %vm330, %v326
        %332 = vst.msk [vmem:[%s218 + $0x8] sm:$0xff] %vm330, %v329
        %v333 = vmul.f32 %v302, %v302
        %v334 = vmul.f32 %v304, %v304
        %v335 = vmul.f32 %v306, %v306
        %v336 = vmul.f32 %v308, %v308
        %v337 = vadd.f32 %v333, %v334
        %338 = vadd.xlane.f32.xlu0 %v337
        %v339 = vpop.xlane.xlu0 %338
        %v340 = vadd.f32 %v335, %v336
        %341 = vadd.xlane.f32.xlu0 %v340
        %v342 = vpop.xlane.xlu0 %341
        %vm343 = vcmask 15368
        %344 = vst.msk [vmem:[%s218] sm:$0xff] %vm343, %v339
        %345 = vst.msk [vmem:[%s218 + $0x8] sm:$0xff] %vm343, %v342
        %s346 = sand.u32 %s77, 1
        %s347 = scalar_lea.sflag [#allocation4], %s346
        %s348 = sand.u32 %s77, 1
        %s349 = smul.addr %s348, 16
        %s350 = scalar_lea.vmem [#allocation7], %s349
        %p351 = scmp.lt.s32.totalorder %s22, 1
        %s352 = scalar_select %p351, %s22, 1
        %s353 = smul.addr %s352, 2
        %s354 = smul.addr %s353, 8
        %s355 = scalar_lea.vmem %s3, %s354
        // Predicated region
        $region37: #{tpu_custom_call.1} parent=27 // pred_check
          %p356 = pneg %p87
        $region38: #{tpu_custom_call.1} parent=27 // pred_check_branch
          %358 = sbr.rel (%p356) target = $region40
        $region39: #{tpu_custom_call.1} parent=27 // pred_region
          %s359 = smul.u32 2, %s22
          %s361 = ssub.s32 256, 256
          %362 = vsyncadd %s347, %s361
          %s363 = smul.addr %s359, 64
          %s364 = scalar_lea.hbm %s2, %s363
          %s365 = sshll.u32 %s350, 4
          %s366 = int_to_ptr.vmem [resolvable:$true] %s365
          %371 = dma.vmem_to_hbm [thread:$0]  %s366, 256, %s364, %s347, 128, 256, 8
        $region40: #{tpu_custom_call.1} parent=27 // pred_fallthru
          _
        // Predicated region
        $region41: #{tpu_custom_call.1} parent=27 // pred_check
          %p372 = pneg %p113
        $region42: #{tpu_custom_call.1} parent=27 // pred_check_branch
          %374 = sbr.rel (%p372) target = $region44
        $region43: #{tpu_custom_call.1} parent=27 // pred_region
          _
        $region44: #{tpu_custom_call.1} parent=27 // pred_fallthru
          _
      $region28: #{tpu_custom_call.1} parent=5 // pred_fallthru
        _
      %p375 = scmp.le.s32.totalorder 2, %s17
      // Predicated region
      $region45: #{tpu_custom_call.1} parent=5 // pred_check
        %p376 = pneg %p375
      $region46: #{tpu_custom_call.1} parent=5 // pred_check_branch
        %378 = sbr.rel (%p376) target = $region48
      $region47: #{tpu_custom_call.1} parent=5 // pred_region
        %s379 = ssub.s32 %s17, 2
        // Predicated region
        $region49: #{tpu_custom_call.1} parent=47 // pred_check
          %p380 = pneg %p93
        $region50: #{tpu_custom_call.1} parent=47 // pred_check_branch
          %382 = sbr.rel (%p380) target = $region52
        $region51: #{tpu_custom_call.1} parent=47 // pred_region
          %s383 = sand.u32 %s78, 1
          %s384 = scalar_lea.sflag [#allocation4], %s383
          %s385 = sand.u32 %s78, 1
          %s386 = smul.addr %s385, 16
          %s387 = scalar_lea.vmem [#allocation7], %s386
          %388 = dma.done %s384, 256
        $region52: #{tpu_custom_call.1} parent=47 // pred_fallthru
          _
        // Predicated region
        $region53: #{tpu_custom_call.1} parent=47 // pred_check
          %p389 = pneg %p119
        $region54: #{tpu_custom_call.1} parent=47 // pred_check_branch
          %391 = sbr.rel (%p389) target = $region56
        $region55: #{tpu_custom_call.1} parent=47 // pred_region
          %p392 = scmp.lt.s32.totalorder %s23, 1
          %s393 = scalar_select %p392, %s23, 1
          %s394 = smul.addr %s393, 2
          %s395 = smul.addr %s394, 8
          %s396 = scalar_lea.vmem %s3, %s395
        $region56: #{tpu_custom_call.1} parent=47 // pred_fallthru
          _
      $region48: #{tpu_custom_call.1} parent=5 // pred_fallthru
        _
    $region6: #{tpu_custom_call.1} parent=1 // loop_footer
      %s21 = sadd.s32 1, %s17
    $region7: #{tpu_custom_call.1} parent=1 // loop_footer_branch
      %16 = sbr.rel target = $region3
    $region8: #{tpu_custom_call.1} parent=1 // loop_exit
      _
    %397 = vsyncpa [#allocation3], 1
    %s398 = scalar_lea.sflag [#allocation3], 1
    %399 = vsyncpa %s398, 1
    %400 = vsyncpa [#allocation6], 1
    %401 = vsyncpa [#allocation4], 1
    %s402 = scalar_lea.sflag [#allocation4], 1
    %403 = vsyncpa %s402, 1

</llo_original>
